<compile_context>
chip_gen: v6e
topology: v6e:2x2x1
jax: 0.10.0
libtpu: 0.0.40
codegen_flags: <defaults>
</compile_context>

<pallas_src>
import jax
import jax.numpy as jnp
from jax.experimental import pallas as pl
from jax.experimental.pallas import tpu as pltpu


def _ls_ce_rows_kernel(x_ref, tgt_ref, smooth_ref, nll_ref):
    """Per-row pieces of label-smoothing CE for one (row_tile, C) block."""
    x = x_ref[...].astype(jnp.float32)                   # (TN, C) f32 math
    tn, c = x.shape

    # Numerically stable log_softmax pieces, without materializing log_preds.
    m = jnp.max(x, axis=-1, keepdims=True)                # (TN, 1)
    shifted = x - m                                       # (TN, C)
    lse = jnp.log(jnp.sum(jnp.exp(shifted), axis=-1, keepdims=True))  # EUP+XLU
    ssum = jnp.sum(shifted, axis=-1, keepdims=True)       # (TN, 1)

    # shifted[row, target[row]] via one-hot compare+select (no gather).
    tgt = tgt_ref[...]                                    # (TN, 1) int32
    col = jax.lax.broadcasted_iota(jnp.int32, (tn, c), 1)
    picked = jnp.sum(jnp.where(col == tgt, shifted, 0.0),
                     axis=-1, keepdims=True)              # (TN, 1)

    smooth_ref[...] = float(c) * lse - ssum               # -sum(log_preds) per row
    nll_ref[...] = lse - picked                           # -log_preds[target] per row


def _vmem_capacity_bytes():
    """(per-core VMEM bytes, whether the query succeeded)."""
    try:
        return int(pltpu.get_tpu_info().vmem_capacity_bytes), True
    except Exception:
        return 64 * 2**20, False      # conservative (v7x per-TC size)


def _logits_spec(row_tile, c, deep_buffer):
    index_map = lambda i: (i, 0)
    if deep_buffer:
        try:
            # Deeper pipelining on the logits stream (v7x: high BW, small VMEM).
            return pl.BlockSpec((row_tile, c), index_map,
                                pipeline_mode=pl.Buffered(3))
        except Exception:
            pass                      # older API: fall back to default 2-deep
    return pl.BlockSpec((row_tile, c), index_map)


def label_smoothing_cross_entropy(output, target, e=0.1, reduction="mean",
                                  row_tile=None):
    """output: (N, C) float logits; target: (N,) int class ids.

    Returns a scalar for reduction in {'mean','sum'}, per-row values otherwise.
    """
    n, c = output.shape
    in_itemsize = jnp.dtype(output.dtype).itemsize

    vmem_bytes, vmem_known = _vmem_capacity_bytes()
    # Headroom for Mosaic internal scratch / outputs: ~96 MiB on 128 MiB parts
    # (v5e/v6e), ~48 MiB on 64 MiB-per-TC parts (v7x).
    budget = (vmem_bytes * 3) // 4
    is_small_vmem = vmem_known and vmem_bytes <= 64 * 2**20
    n_in_bufs = 3 if is_small_vmem else 2   # budget for Buffered(3) on v7x

    # Per-row VMEM footprint: pipelined input buffers (input dtype) + ~5
    # f32-sized in-kernel temporaries + targets/outputs.
    per_row = n_in_bufs * c * in_itemsize + 5 * c * 4 + 32
    slack = 2 * 2**20

    # Never tile past the (8-rounded-down) row count so blocks stay <= N for
    # every realistic N (only N < 8 ever sees a block larger than the array).
    row_cap = max(8, (n // 8) * 8)

    if row_tile is None:
        # Per-step logits block: big enough to amortize the ~0.35us/step fixed
        # cost at each generation's HBM BW, small enough for its VMEM budget.
        target_blk = 8 * 2**20 if vmem_bytes >= 128 * 2**20 else 4 * 2**20
        rt = target_blk // max(1, c * in_itemsize)
        rt = min(rt, max(8, (budget - slack) // per_row))
        row_tile = rt
    row_tile = max(8, min(int(row_tile), row_cap))
    row_tile = (row_tile // 8) * 8
    if in_itemsize < 4 and row_tile >= 16:
        row_tile = (row_tile // 16) * 16   # prefer packed-sublane multiples

    num_steps = pl.cdiv(n, row_tile)
    deep_buffer = is_small_vmem and num_steps >= 3   # only worth it on long grids

    needed = row_tile * per_row + slack
    vmem_limit = int(min(budget, max(16 * 2**20, needed)))

    tgt2d = target.astype(jnp.int32).reshape(n, 1)

    smooth_rows, nll_rows = pl.pallas_call(
        _ls_ce_rows_kernel,
        out_shape=(jax.ShapeDtypeStruct((n, 1), jnp.float32),
                   jax.ShapeDtypeStruct((n, 1), jnp.float32)),
        grid_spec=pltpu.PrefetchScalarGridSpec(
            num_scalar_prefetch=0,
            grid=(num_steps,),
            in_specs=[
                _logits_spec(row_tile, c, deep_buffer),
                pl.BlockSpec((row_tile, 1), lambda i: (i, 0)),
            ],
            out_specs=[
                pl.BlockSpec((row_tile, 1), lambda i: (i, 0)),
                pl.BlockSpec((row_tile, 1), lambda i: (i, 0)),
            ],
        ),
        compiler_params=pltpu.CompilerParams(
            dimension_semantics=("parallel",),
            vmem_limit_bytes=vmem_limit,
        ),
    )(output, tgt2d)

    smooth_rows = smooth_rows[:, 0]
    nll_rows = nll_rows[:, 0]

    if reduction == "mean":
        loss, nll = jnp.mean(smooth_rows), jnp.mean(nll_rows)
    elif reduction == "sum":
        loss, nll = jnp.sum(smooth_rows), jnp.sum(nll_rows)
    else:  # reduction='none' -> per-sample, matching reduce_loss / nll_loss
        loss, nll = smooth_rows, nll_rows
    return (1.0 - e) * nll + e * (loss / jnp.float32(c))


def _reference(output, target, e=0.1, reduction="mean"):
    # Pure-JAX reference mirroring the PyTorch module.
    c = output.shape[-1]
    log_preds = jax.nn.log_softmax(output.astype(jnp.float32), axis=-1)
    smooth = -log_preds.sum(axis=-1)
    nll_per = -jnp.take_along_axis(log_preds, target[:, None].astype(jnp.int32),
                                   axis=-1)[:, 0]
    if reduction == "mean":
        red = jnp.mean
    elif reduction == "sum":
        red = jnp.sum
    else:
        red = lambda x: x
    return (1 - e) * red(nll_per) + e * (red(smooth) / c)


if __name__ == "__main__":
    key = jax.random.PRNGKey(0)
    k1, k2, k3, k4, k5, k6 = jax.random.split(key, 6)

    # Small shapes consistent with the module: (N, C) logits + int targets.
    N, C = 8, 32
    logits = jax.random.normal(k1, (N, C), dtype=jnp.float32)
    target = jax.random.randint(k2, (N,), 0, C, dtype=jnp.int32)

    out = label_smoothing_cross_entropy(logits, target, e=0.1, reduction="mean")
    out = jax.block_until_ready(out)
    ref = _reference(logits, target, e=0.1, reduction="mean")
    assert jnp.allclose(out, ref, atol=1e-5, rtol=1e-5), (out, ref)

    # Non-divisible N: multi-step grid with a ragged last block (no logits
    # padding anywhere), 'sum' reduction.
    N2, C2 = 10, 24
    logits2 = jax.random.normal(k3, (N2, C2), dtype=jnp.float32)
    target2 = jax.random.randint(k4, (N2,), 0, C2, dtype=jnp.int32)
    out2 = jax.block_until_ready(
        label_smoothing_cross_entropy(logits2, target2, e=0.1,
                                      reduction="sum", row_tile=8))
    ref2 = _reference(logits2, target2, e=0.1, reduction="sum")
    assert jnp.allclose(out2, ref2, atol=1e-4, rtol=1e-5), (out2, ref2)

    # bf16 logits path (halved HBM traffic; in-kernel math stays f32).
    N3, C3 = 16, 32
    logits3 = jax.random.normal(k5, (N3, C3), dtype=jnp.float32).astype(jnp.bfloat16)
    target3 = jax.random.randint(k6, (N3,), 0, C3, dtype=jnp.int32)
    out3 = jax.block_until_ready(
        label_smoothing_cross_entropy(logits3, target3, e=0.1, reduction="mean"))
    ref3 = _reference(logits3, target3, e=0.1, reduction="mean")
    assert jnp.allclose(out3, ref3, atol=1e-4, rtol=1e-4), (out3, ref3)

    print("KERNEL_OK")
</pallas_src>

<mosaic_0001>
module attributes {stable_mosaic.version = 11 : i64} {
  func.func @_ls_ce_rows_kernel(%arg0: i32, %arg1: memref<8x32xf32, #tpu.memory_space<vmem>>, %arg2: memref<8x1xi32, #tpu.memory_space<vmem>>, %arg3: memref<8x1xf32, #tpu.memory_space<vmem>>, %arg4: memref<8x1xf32, #tpu.memory_space<vmem>>) attributes {dimension_semantics = [#tpu.dimension_semantics<parallel>], iteration_bounds = array<i64: 1>, scalar_prefetch = 0 : i64, scratch_operands = 0 : i64, tpu.core_type = #tpu.core_type<tc>, window_params = [{transform_indices = @transform_0, window_bounds = array<i64: 8, 32>}, {transform_indices = @transform_1, window_bounds = array<i64: 8, 1>}, {transform_indices = @transform_2, window_bounds = array<i64: 8, 1>}, {transform_indices = @transform_3, window_bounds = array<i64: 8, 1>}]} {
    %c0 = arith.constant 0 : index
    %c0_0 = arith.constant 0 : index
    %0 = vector.load %arg1[%c0, %c0_0] : memref<8x32xf32, #tpu.memory_space<vmem>>, vector<8x32xf32>
    %cst = arith.constant dense<0xFF800000> : vector<8xf32>
    %1 = vector.multi_reduction <maximumf>, %0, %cst [1] : vector<8x32xf32> to vector<8xf32>
    %2 = vector.shape_cast %1 : vector<8xf32> to vector<8x1xf32>
    %3 = vector.broadcast %2 : vector<8x1xf32> to vector<8x32xf32>
    %4 = arith.subf %0, %3 : vector<8x32xf32>
    %5 = math.exp %4 : vector<8x32xf32>
    %cst_1 = arith.constant dense<0.000000e+00> : vector<8xf32>
    %6 = vector.multi_reduction <add>, %5, %cst_1 [1] : vector<8x32xf32> to vector<8xf32>
    %7 = vector.shape_cast %6 : vector<8xf32> to vector<8x1xf32>
    %8 = math.log %7 : vector<8x1xf32>
    %cst_2 = arith.constant dense<0.000000e+00> : vector<8xf32>
    %9 = vector.multi_reduction <add>, %4, %cst_2 [1] : vector<8x32xf32> to vector<8xf32>
    %10 = vector.shape_cast %9 : vector<8xf32> to vector<8x1xf32>
    %c0_3 = arith.constant 0 : index
    %c0_4 = arith.constant 0 : index
    %11 = vector.load %arg2[%c0_3, %c0_4] : memref<8x1xi32, #tpu.memory_space<vmem>>, vector<8x1xi32>
    %12 = tpu.iota {dimensions = array<i32: 1>} : vector<8x32xi32>
    %13 = vector.broadcast %11 : vector<8x1xi32> to vector<8x32xi32>
    %14 = arith.cmpi eq, %12, %13 : vector<8x32xi32>
    %cst_5 = arith.constant 0.000000e+00 : f32
    %15 = vector.broadcast %cst_5 : f32 to vector<8x32xf32>
    %16 = arith.select %14, %4, %15 : vector<8x32xi1>, vector<8x32xf32>
    %cst_6 = arith.constant dense<0.000000e+00> : vector<8xf32>
    %17 = vector.multi_reduction <add>, %16, %cst_6 [1] : vector<8x32xf32> to vector<8xf32>
    %18 = vector.shape_cast %17 : vector<8xf32> to vector<8x1xf32>
    %cst_7 = arith.constant 3.200000e+01 : f32
    %19 = vector.broadcast %cst_7 : f32 to vector<8x1xf32>
    %20 = arith.mulf %19, %8 : vector<8x1xf32>
    %21 = arith.subf %20, %10 : vector<8x1xf32>
    %c0_8 = arith.constant 0 : index
    %c0_9 = arith.constant 0 : index
    %22 = vector.load %arg3[%c0_8, %c0_9] : memref<8x1xf32, #tpu.memory_space<vmem>>, vector<8x1xf32>
    tpu.vector_store %arg3[%c0_8, %c0_9], %21 {strides = array<i32>} : memref<8x1xf32, #tpu.memory_space<vmem>>, vector<8x1xf32>,
    %23 = arith.subf %8, %18 : vector<8x1xf32>
    %c0_10 = arith.constant 0 : index
    %c0_11 = arith.constant 0 : index
    %24 = vector.load %arg4[%c0_10, %c0_11] : memref<8x1xf32, #tpu.memory_space<vmem>>, vector<8x1xf32>
    tpu.vector_store %arg4[%c0_10, %c0_11], %23 {strides = array<i32>} : memref<8x1xf32, #tpu.memory_space<vmem>>, vector<8x1xf32>,
    return
  }
  func.func @transform_0(%arg0: i32) -> (i32, i32) {
    %c0_i32 = arith.constant 0 : i32
    %c0_i32_0 = arith.constant 0 : i32
    return %arg0, %c0_i32 : i32, i32
  }
  func.func @transform_1(%arg0: i32) -> (i32, i32) {
    %c0_i32 = arith.constant 0 : i32
    %c0_i32_0 = arith.constant 0 : i32
    return %arg0, %c0_i32 : i32, i32
  }
  func.func @transform_2(%arg0: i32) -> (i32, i32) {
    %c0_i32 = arith.constant 0 : i32
    %c0_i32_0 = arith.constant 0 : i32
    return %arg0, %c0_i32 : i32, i32
  }
  func.func @transform_3(%arg0: i32) -> (i32, i32) {
    %c0_i32 = arith.constant 0 : i32
    %c0_i32_0 = arith.constant 0 : i32
    return %arg0, %c0_i32 : i32, i32
  }
}

</mosaic_0001>

<llo_original>
// kernel: tpu_custom_call.1
$region0: #{tpu_custom_call.1}
  #allocation0 [shape = 'u32[]', space=smem, size = 0x4, offset = 0x4, fixed_abs, tag = 'smem constant byte address 0x4 - core index']
  #allocation1 [shape = 'u32[144,128]{1,0:T(1,128)}', space=vmem, size = 0x12000, scoped, tag = 'internal scratch']
  %s0 = inlined_call_operand.vmem [shape: f32[8,32], index: 0, kind: input, shape index: {}]
  %s1 = inlined_call_operand.vmem [shape: s32[8,1], index: 1, kind: input, shape index: {}]
  %s2 = inlined_call_operand.vmem [shape: f32[8,1], index: 2, kind: output, shape index: {0}]
  %s3 = inlined_call_operand.vmem [shape: f32[8,1], index: 3, kind: output, shape index: {1}]
  %4 = xla_tuple %s2, %s3
  %s5 = sld [smem:[#allocation0]]
  $region26: #{tpu_custom_call.1} parent=0
    _
  %s7 = ssub.s32 1, %s5
  %s8 = scalar_select 0, %s7, %s5
  // Predicated region
  $region2: #{tpu_custom_call.1} parent=0 // pred_check
    _
  $region3: #{tpu_custom_call.1} parent=0 // pred_check_branch
    %10 = sbr.rel (0) target = $region5
  $region4: #{tpu_custom_call.1} parent=0 // pred_region
    _
  $region5: #{tpu_custom_call.1} parent=0 // pred_fallthru
    _
  // Predicated region
  $region6: #{tpu_custom_call.1} parent=0 // pred_check
    _
  $region7: #{tpu_custom_call.1} parent=0 // pred_check_branch
    %12 = sbr.rel (0) target = $region9
  $region8: #{tpu_custom_call.1} parent=0 // pred_region
    _
  $region9: #{tpu_custom_call.1} parent=0 // pred_fallthru
    _
  %v13 = vld [vmem:[%s0] sm:$0xff]
  %vm14 = vcmask 261120
  %v15 = vsel %vm14, %v13, -inf
  %16 = vmax.xlane.f32.xlu0 %v15
  %v17 = vpop.xlane.xlu0 %16
  %v18 = vsub.f32 %v13, %v17
  %v19 = vmul.f32 %v18, 1.442695
  %v20 = vpow.pop %v19
  %v21 = vsel %vm14, %v20, 0.0
  %22 = vadd.xlane.f32.xlu0 %v21
  %v23 = vpop.xlane.xlu0 %22
  %v24 = vlog2.pop %v23
  %v25 = vmul.f32 %v24, 0.6931472
  %v26 = vsel %vm14, %v18, 0.0
  %27 = vadd.xlane.f32.xlu0 %v26
  %v28 = vpop.xlane.xlu0 %27
  %v29 = vld [vmem:[%s1] sm:$0xff]
  %v30 = vlaneseq
  %v31 = vand.u32 %v30, 127
  %32 = vset.pattern.permute.xlu0 0
  %33 = vperm.xlu0 %32, %v29
  %v34 = vpop.permute.xlu0 %33
  %vm35 = vcmp.eq.s32.totalorder %v31, %v34
  %v36 = vsel %vm35, %v18, 0.0
  %v37 = vsel %vm14, %v36, 0.0
  %38 = vadd.xlane.f32.xlu0 %v37
  %v39 = vpop.xlane.xlu0 %38
  %v40 = vmul.f32 %v25, 32.0
  %v41 = vsub.f32 %v40, %v28
  %vm42 = vcmask 7168
  %43 = vst.msk [vmem:[%s2] sm:$0xff] %vm42, %v41
  %v44 = vsub.f32 %v25, %v39
  %45 = vst.msk [vmem:[%s3] sm:$0xff] %vm42, %v44
  // Predicated region
  $region10: #{tpu_custom_call.1} parent=0 // pred_check
    _
  $region11: #{tpu_custom_call.1} parent=0 // pred_check_branch
    %47 = sbr.rel (0) target = $region13
  $region12: #{tpu_custom_call.1} parent=0 // pred_region
    _
  $region13: #{tpu_custom_call.1} parent=0 // pred_fallthru
    _
  // Predicated region
  $region14: #{tpu_custom_call.1} parent=0 // pred_check
    _
  $region15: #{tpu_custom_call.1} parent=0 // pred_check_branch
    %49 = sbr.rel (0) target = $region17
  $region16: #{tpu_custom_call.1} parent=0 // pred_region
    _
  $region17: #{tpu_custom_call.1} parent=0 // pred_fallthru
    _
  // Predicated region
  $region18: #{tpu_custom_call.1} parent=0 // pred_check
    _
  $region19: #{tpu_custom_call.1} parent=0 // pred_check_branch
    %51 = sbr.rel (0) target = $region21
  $region20: #{tpu_custom_call.1} parent=0 // pred_region
    _
  $region21: #{tpu_custom_call.1} parent=0 // pred_fallthru
    _
  // Predicated region
  $region22: #{tpu_custom_call.1} parent=0 // pred_check
    _
  $region23: #{tpu_custom_call.1} parent=0 // pred_check_branch
    %53 = sbr.rel (0) target = $region25
  $region24: #{tpu_custom_call.1} parent=0 // pred_region
    _
  $region25: #{tpu_custom_call.1} parent=0 // pred_fallthru
    _

</llo_original>
